<compile_context>
chip_gen: v5e
topology: v5e:2x2
jax: 0.10.0
libtpu: 0.0.40
codegen_flags: <defaults>
</compile_context>

<pallas_src>
import jax
import jax.numpy as jnp
from jax.experimental import pallas as pl
from jax.experimental.pallas import tpu as pltpu


def vnet_kernel(xt_ref, w1t_ref, b1_ref, w2_ref, b2_ref, o_ref):
    # fc1 in transposed layout (batch on lanes): (H, D) @ (D, TB) -> (H, TB).
    h = jnp.dot(w1t_ref[...], xt_ref[...], preferred_element_type=jnp.float32)
    # Bias (H,1) broadcasts over lanes (batch); ReLU on the VPU.
    h = jnp.maximum(h + b1_ref[...], 0.0)
    # fc2: VPU multiply + sublane (XLU) reduction instead of an N=1 MXU matmul.
    v = jnp.sum(h * w2_ref[...], axis=0, keepdims=True)   # (1, TB)
    v = v + b2_ref[0]                                      # scalar bias (SMEM)
    o_ref[...] = v.astype(o_ref.dtype)


def vnet_forward(x, w1, b1, w2, b2, *, tb=None):
    """x: (B, D) float32; w1: (D, H); b1: (H,); w2: (H, 1); b2: (1,).
    Returns (B, 1) float32 (same contract as the PyTorch module)."""
    B, D = x.shape
    H = w1.shape[1]

    # Batch tile: multiple of 128 (lane width), capped so VMEM stays tiny.
    if tb is None:
        tb = min(512, pl.cdiv(B, 128) * 128)
    b_pad = pl.cdiv(B, tb) * tb

    # Layout plumbing only (lane-dense batch); no compute hoisted out of the kernel.
    xt = jnp.pad(x.T, ((0, 0), (0, b_pad - B)))        # (D, B_pad)
    w1t = w1.T                                         # (H, D)
    b1c = b1.reshape(H, 1).astype(jnp.float32)         # (H, 1) column
    w2c = w2.reshape(H, 1).astype(jnp.float32)         # (H, 1) column
    b2s = b2.reshape(1).astype(jnp.float32)            # (1,) scalar -> SMEM

    grid = (b_pad // tb,)
    out = pl.pallas_call(
        vnet_kernel,
        out_shape=jax.ShapeDtypeStruct((1, b_pad), x.dtype),
        grid=grid,
        in_specs=[
            pl.BlockSpec((D, tb), lambda i: (0, i)),     # x^T tile (pipelined)
            pl.BlockSpec((H, D), lambda i: (0, 0)),      # w1^T  (VMEM-resident)
            pl.BlockSpec((H, 1), lambda i: (0, 0)),      # b1    (VMEM-resident)
            pl.BlockSpec((H, 1), lambda i: (0, 0)),      # w2    (VMEM-resident)
            pl.BlockSpec(memory_space=pltpu.MemorySpace.SMEM),  # b2 scalar
        ],
        out_specs=pl.BlockSpec((1, tb), lambda i: (0, i)),
        compiler_params=pltpu.CompilerParams(
            dimension_semantics=("parallel",),
            vmem_limit_bytes=32 * 1024 * 1024,
        ),
    )(xt, w1t, b1c, w2c, b2s)

    # Back to the PyTorch-equivalent (B, 1) contract.
    return out[0, :B].reshape(B, 1)


def init_vnet_params(key, input_dim, hidden_dim):
    """Deterministic synthetic init (uniform, roughly PyTorch Linear scale)."""
    k1, k2, k3, k4 = jax.random.split(key, 4)
    lim1 = 1.0 / jnp.sqrt(input_dim)
    lim2 = 1.0 / jnp.sqrt(hidden_dim)
    w1 = jax.random.uniform(k1, (input_dim, hidden_dim), jnp.float32, -lim1, lim1)
    b1 = jax.random.uniform(k2, (hidden_dim,), jnp.float32, -lim1, lim1)
    w2 = jax.random.uniform(k3, (hidden_dim, 1), jnp.float32, -lim2, lim2)
    b2 = jax.random.uniform(k4, (1,), jnp.float32, -lim2, lim2)
    return w1, b1, w2, b2


if __name__ == "__main__":
    key = jax.random.PRNGKey(0)
    kx, kp, kx2 = jax.random.split(key, 3)

    # CartPole-v0 state dim = 4; small hidden dim, as in the original script.
    input_dim, hidden_dim = 4, 32
    w1, b1, w2, b2 = init_vnet_params(kp, input_dim, hidden_dim)

    def ref_fn(x):
        h = jnp.maximum(
            jnp.dot(x, w1, precision=jax.lax.Precision.HIGHEST) + b1, 0.0)
        return jnp.dot(h, w2, precision=jax.lax.Precision.HIGHEST) + b2

    # Small batch (per-step value calls in A2C).
    x = jax.random.normal(kx, (8, input_dim), jnp.float32)
    out = jax.block_until_ready(vnet_forward(x, w1, b1, w2, b2))
    assert out.shape == (8, 1)
    assert jnp.allclose(out, ref_fn(x), atol=1e-4, rtol=1e-5)

    # Larger, non-multiple-of-tile batch: exercises padding + a multi-step grid
    # with the weights held VMEM-resident across iterations.
    x2 = jax.random.normal(kx2, (300, input_dim), jnp.float32)
    out2 = jax.block_until_ready(vnet_forward(x2, w1, b1, w2, b2, tb=128))
    assert out2.shape == (300, 1)
    assert jnp.allclose(out2, ref_fn(x2), atol=1e-4, rtol=1e-5)

    print("KERNEL_OK")
</pallas_src>

<mosaic_0001>
module attributes {stable_mosaic.version = 11 : i64} {
  func.func @vnet_kernel(%arg0: i32, %arg1: memref<4x128xf32, #tpu.memory_space<vmem>>, %arg2: memref<32x4xf32, #tpu.memory_space<vmem>>, %arg3: memref<32x1xf32, #tpu.memory_space<vmem>>, %arg4: memref<32x1xf32, #tpu.memory_space<vmem>>, %arg5: memref<1xf32, #tpu.memory_space<smem>>, %arg6: memref<1x128xf32, #tpu.memory_space<vmem>>) attributes {dimension_semantics = [#tpu.dimension_semantics<parallel>], iteration_bounds = array<i64: 1>, scalar_prefetch = 0 : i64, scratch_operands = 0 : i64, tpu.core_type = #tpu.core_type<tc>, window_params = [{transform_indices = @transform_0, window_bounds = array<i64: 4, 128>}, {pipeline_mode = #tpu.pipeline_mode<synchronous>, transform_indices = @transform_1, window_bounds = array<i64: 32, 4>}, {pipeline_mode = #tpu.pipeline_mode<synchronous>, transform_indices = @transform_2, window_bounds = array<i64: 32, 1>}, {pipeline_mode = #tpu.pipeline_mode<synchronous>, transform_indices = @transform_3, window_bounds = array<i64: 32, 1>}, {transform_indices = @transform_4, window_bounds = array<i64: 1>}, {transform_indices = @transform_5, window_bounds = array<i64: 1, 128>}]} {
    %c0 = arith.constant 0 : index
    %c0_0 = arith.constant 0 : index
    %0 = vector.load %arg2[%c0, %c0_0] : memref<32x4xf32, #tpu.memory_space<vmem>>, vector<32x4xf32>
    %c0_1 = arith.constant 0 : index
    %c0_2 = arith.constant 0 : index
    %1 = vector.load %arg1[%c0_1, %c0_2] : memref<4x128xf32, #tpu.memory_space<vmem>>, vector<4x128xf32>
    %cst = arith.constant dense<0.000000e+00> : vector<32x128xf32>
    %2 = tpu.matmul %0, %1, %cst {dimension_numbers = #tpu.dot_dimension_numbers<[1], [0], [0], [1], [0, 0, 1, 1], [], []>} : vector<32x4xf32>, vector<4x128xf32>, vector<32x128xf32> -> vector<32x128xf32>
    %c0_3 = arith.constant 0 : index
    %c0_4 = arith.constant 0 : index
    %3 = vector.load %arg3[%c0_3, %c0_4] : memref<32x1xf32, #tpu.memory_space<vmem>>, vector<32x1xf32>
    %4 = vector.broadcast %3 : vector<32x1xf32> to vector<32x128xf32>
    %5 = arith.addf %2, %4 : vector<32x128xf32>
    %cst_5 = arith.constant 0.000000e+00 : f32
    %6 = vector.broadcast %cst_5 : f32 to vector<32x128xf32>
    %7 = arith.maximumf %5, %6 : vector<32x128xf32>
    %c0_6 = arith.constant 0 : index
    %c0_7 = arith.constant 0 : index
    %8 = vector.load %arg4[%c0_6, %c0_7] : memref<32x1xf32, #tpu.memory_space<vmem>>, vector<32x1xf32>
    %9 = vector.broadcast %8 : vector<32x1xf32> to vector<32x128xf32>
    %10 = arith.mulf %7, %9 : vector<32x128xf32>
    %cst_8 = arith.constant dense<0.000000e+00> : vector<128xf32>
    %11 = vector.multi_reduction <add>, %10, %cst_8 [0] : vector<32x128xf32> to vector<128xf32>
    %12 = vector.shape_cast %11 : vector<128xf32> to vector<1x128xf32>
    %c0_9 = arith.constant 0 : index
    %13 = memref.load %arg5[%c0_9] : memref<1xf32, #tpu.memory_space<smem>>
    %14 = vector.broadcast %13 : f32 to vector<1x128xf32>
    %15 = arith.addf %12, %14 : vector<1x128xf32>
    %c0_10 = arith.constant 0 : index
    %c0_11 = arith.constant 0 : index
    %16 = vector.load %arg6[%c0_10, %c0_11] : memref<1x128xf32, #tpu.memory_space<vmem>>, vector<1x128xf32>
    tpu.vector_store %arg6[%c0_10, %c0_11], %15 {strides = array<i32>} : memref<1x128xf32, #tpu.memory_space<vmem>>, vector<1x128xf32>,
    return
  }
  func.func @transform_0(%arg0: i32) -> (i32, i32) {
    %c0_i32 = arith.constant 0 : i32
    %c0_i32_0 = arith.constant 0 : i32
    return %c0_i32, %arg0 : i32, i32
  }
  func.func @transform_1(%arg0: i32) -> (i32, i32) {
    %c0_i32 = arith.constant 0 : i32
    %c0_i32_0 = arith.constant 0 : i32
    %c0_i32_1 = arith.constant 0 : i32
    return %c0_i32, %c0_i32_0 : i32, i32
  }
  func.func @transform_2(%arg0: i32) -> (i32, i32) {
    %c0_i32 = arith.constant 0 : i32
    %c0_i32_0 = arith.constant 0 : i32
    %c0_i32_1 = arith.constant 0 : i32
    return %c0_i32, %c0_i32_0 : i32, i32
  }
  func.func @transform_3(%arg0: i32) -> (i32, i32) {
    %c0_i32 = arith.constant 0 : i32
    %c0_i32_0 = arith.constant 0 : i32
    %c0_i32_1 = arith.constant 0 : i32
    return %c0_i32, %c0_i32_0 : i32, i32
  }
  func.func @transform_4(%arg0: i32) -> i32 {
    %c0_i32 = arith.constant 0 : i32
    %c0_i32_0 = arith.constant 0 : i32
    return %c0_i32 : i32
  }
  func.func @transform_5(%arg0: i32) -> (i32, i32) {
    %c0_i32 = arith.constant 0 : i32
    %c0_i32_0 = arith.constant 0 : i32
    return %c0_i32, %arg0 : i32, i32
  }
}

</mosaic_0001>

<llo_original>
// kernel: tpu_custom_call.1
$region0: #{tpu_custom_call.1}
  #allocation0 [shape = 'u32[]', space=smem, size = 0x4, offset = 0x4, fixed_abs, tag = 'smem constant byte address 0x4 - core index']
  #allocation1 [shape = 'u32[72,128]{1,0:T(1,128)}', space=vmem, size = 0x9000, scoped, tag = 'internal scratch']
  #allocation2 [shape = 'f32[1]{0:T(128)S(6)}', space=smem, size = 0x200, scoped, tag = 'scoped memory for tpu_custom_call.1']
  %s0 = inlined_call_operand.vmem [shape: f32[4,128], index: 0, kind: input, shape index: {}]
  %s1 = inlined_call_operand.vmem [shape: f32[32,4], index: 1, kind: input, shape index: {}]
  %s2 = inlined_call_operand.vmem [shape: f32[32,1], index: 2, kind: input, shape index: {}]
  %s3 = inlined_call_operand.vmem [shape: f32[32,1], index: 3, kind: input, shape index: {}]
  %s4 = inlined_call_operand.<no memory space> [shape: f32[1], index: 4, kind: input, shape index: {}]
  %s5 = inlined_call_operand.hbm [shape: f32[1,128], index: 5, kind: output, shape index: {}]
  %s6 = sld [smem:[#allocation0]]
  $region30: #{tpu_custom_call.1} parent=0
    _
  %s8 = ssub.s32 1, %s6
  %s9 = scalar_select 0, %s8, %s6
  %10 = sst [smem:[#allocation2]] %s4
  $region1: #{tpu_custom_call.1} parent=0
    #allocation3 [shape = 'u8[512]{0}', space=vmem, size = 0x400, scoped, tag = 'output window, operand 0, single buffered']
    #allocation4 [shape = 's32[1]{0}', space=sflag, size = 0x4, scoped, tag = 'scoped memory for tpu_custom_call.1']
    %11 = vsyncpa [#allocation4], 0
    // Predicated region
    $region2: #{tpu_custom_call.1} parent=1 // pred_check
      _
    $region3: #{tpu_custom_call.1} parent=1 // pred_check_branch
      %13 = sbr.rel (0) target = $region5
    $region4: #{tpu_custom_call.1} parent=1 // pred_region
      _
    $region5: #{tpu_custom_call.1} parent=1 // pred_fallthru
      _
    // Predicated region
    $region6: #{tpu_custom_call.1} parent=1 // pred_check
      _
    $region7: #{tpu_custom_call.1} parent=1 // pred_check_branch
      %15 = sbr.rel (0) target = $region9
    $region8: #{tpu_custom_call.1} parent=1 // pred_region
      _
    $region9: #{tpu_custom_call.1} parent=1 // pred_fallthru
      _
    // Predicated region
    $region10: #{tpu_custom_call.1} parent=1 // pred_check
      _
    $region11: #{tpu_custom_call.1} parent=1 // pred_check_branch
      %17 = sbr.rel (0) target = $region13
    $region12: #{tpu_custom_call.1} parent=1 // pred_region
      _
    $region13: #{tpu_custom_call.1} parent=1 // pred_fallthru
      _
    // Predicated region
    $region14: #{tpu_custom_call.1} parent=1 // pred_check
      _
    $region15: #{tpu_custom_call.1} parent=1 // pred_check_branch
      %19 = sbr.rel (0) target = $region17
    $region16: #{tpu_custom_call.1} parent=1 // pred_region
      _
    $region17: #{tpu_custom_call.1} parent=1 // pred_fallthru
      _
    // Predicated region
    $region18: #{tpu_custom_call.1} parent=1 // pred_check
      _
    $region19: #{tpu_custom_call.1} parent=1 // pred_check_branch
      %21 = sbr.rel (0) target = $region21
    $region20: #{tpu_custom_call.1} parent=1 // pred_region
      _
    $region21: #{tpu_custom_call.1} parent=1 // pred_fallthru
      _
    %v22 = vld [vmem:[%s1] sm:$0xff]
    %v23 = vld [vmem:[%s1 + $0x8] sm:$0xff]
    %v24 = vld [vmem:[%s1 + $0x10] sm:$0xff]
    %v25 = vld [vmem:[%s1 + $0x18] sm:$0xff]
    %v26 = vld [vmem:[%s0] sm:$0xf]
    %v27 = vld [vmem:[%s2] sm:$0xff]
    %v28 = vld [vmem:[%s2 + $0x8] sm:$0xff]
    %v29 = vld [vmem:[%s2 + $0x10] sm:$0xff]
    %v30 = vld [vmem:[%s2 + $0x18] sm:$0xff]
    %32 = vset.pattern.permute.xlu0 0
    %33 = vperm.xlu0 %32, %v27
    %v34 = vpop.permute.xlu0 %33
    %37 = vset.pattern.permute.xlu0 0
    %38 = vperm.xlu0 %37, %v28
    %v39 = vpop.permute.xlu0 %38
    %42 = vset.pattern.permute.xlu0 0
    %43 = vperm.xlu0 %42, %v29
    %v44 = vpop.permute.xlu0 %43
    %47 = vset.pattern.permute.xlu0 0
    %48 = vperm.xlu0 %47, %v30
    %v49 = vpop.permute.xlu0 %48
    %vm51 = vcmask 31744
    %v53 = vsel %vm51, %v22, 0
    %v56 = vsel %vm51, %v23, 0
    %v59 = vsel %vm51, %v24, 0
    %v62 = vsel %vm51, %v25, 0
    %vm64 = vcmask 1043456
    %v66 = vsel %vm64, %v26, 0
    %68 = vmatpush.msra.mxu0 0.0
    %69 = vmatpush.msra.mxu0 0.0
    %70 = vmatpush.msra.mxu0 0.0
    %71 = vmatpush.msra.mxu0 0.0
    %72 = vmatpush.msra.mxu0 0.0
    %73 = vmatpush.msra.mxu0 0.0
    %74 = vmatpush.msra.mxu0 0.0
    %75 = vmatpush.msra.mxu0 0.0
    %76 = vmatpush.msra.mxu0 0.0
    %77 = vmatpush.msra.mxu0 0.0
    %78 = vmatpush.msra.mxu0 0.0
    %79 = vmatpush.msra.mxu0 0.0
    %80 = vmatpush.msra.mxu0 0.0
    %81 = vmatpush.msra.mxu0 0.0
    %82 = vmatpush.msra.mxu0 0.0
    %83 = vmatpush.msra.mxu0 %v66
    %84 = vmatmul.f32.gmra.mxu0 %v53
    %v85 = vpop.f32.mrf.mxu0
    %v86 = vadd.f32 %v34, %v85
    %87 = vmatmul.f32.gmra.mxu0 %v56
    %v88 = vpop.f32.mrf.mxu0
    %v89 = vadd.f32 %v39, %v88
    %90 = vmatmul.f32.gmra.mxu0 %v59
    %v91 = vpop.f32.mrf.mxu0
    %v92 = vadd.f32 %v44, %v91
    %93 = vmatmul.f32.gmra.mxu0 %v62
    %v94 = vpop.f32.mrf.mxu0
    %v95 = vadd.f32 %v49, %v94
    %96 = vdwg.mxu0
    %v97 = vmax.f32 %v86, 0.0
    %v98 = vmax.f32 %v89, 0.0
    %v99 = vmax.f32 %v92, 0.0
    %v100 = vmax.f32 %v95, 0.0
    %v101 = vld [vmem:[%s3] sm:$0xff]
    %v102 = vld [vmem:[%s3 + $0x8] sm:$0xff]
    %v103 = vld [vmem:[%s3 + $0x10] sm:$0xff]
    %v104 = vld [vmem:[%s3 + $0x18] sm:$0xff]
    %106 = vset.pattern.permute.xlu0 0
    %107 = vperm.xlu0 %106, %v101
    %v108 = vpop.permute.xlu0 %107
    %111 = vset.pattern.permute.xlu0 0
    %112 = vperm.xlu0 %111, %v102
    %v113 = vpop.permute.xlu0 %112
    %116 = vset.pattern.permute.xlu0 0
    %117 = vperm.xlu0 %116, %v103
    %v118 = vpop.permute.xlu0 %117
    %121 = vset.pattern.permute.xlu0 0
    %122 = vperm.xlu0 %121, %v104
    %v123 = vpop.permute.xlu0 %122
    %v125 = vmul.f32 %v97, %v108
    %v126 = vmul.f32 %v98, %v113
    %v127 = vmul.f32 %v99, %v118
    %v128 = vmul.f32 %v100, %v123
    %v129 = vadd.f32 %v125, %v126
    %v130 = vadd.f32 %v129, %v127
    %v131 = vadd.f32 %v130, %v128
    %v132 = vrot.slane %v131, 4
    %v133 = vadd.f32 %v131, %v132
    %v134 = vrot.slane %v133, 2
    %v135 = vadd.f32 %v133, %v134
    %v136 = vrot.slane %v135, 1
    %v137 = vadd.f32 %v135, %v136
    %s138 = sld [smem:[#allocation2]]
    %v139 = vstv %s138
    %v140 = vadd.f32 %v137, %v139
    %141 = vst [vmem:[#allocation3] sm:$0x1] %v140
    // Predicated region
    $region22: #{tpu_custom_call.1} parent=1 // pred_check
      _
    $region23: #{tpu_custom_call.1} parent=1 // pred_check_branch
      %143 = sbr.rel (0) target = $region25
    $region24: #{tpu_custom_call.1} parent=1 // pred_region
      %145 = vsyncadd [#allocation4], 0
      %s147 = sshll.u32 [#allocation3], 4
      %s148 = int_to_ptr.vmem [resolvable:$true] %s147
      %s149 = sshll.u32 %s5, 4
      %s150 = int_to_ptr.hbm [resolvable:$true] %s149
      %152 = dma.vmem_to_hbm [thread:$0]  %s148, 16, %s150, [#allocation4]
    $region25: #{tpu_custom_call.1} parent=1 // pred_fallthru
      _
    // Predicated region
    $region26: #{tpu_custom_call.1} parent=1 // pred_check
      _
    $region27: #{tpu_custom_call.1} parent=1 // pred_check_branch
      %154 = sbr.rel (0) target = $region29
    $region28: #{tpu_custom_call.1} parent=1 // pred_region
      %156 = dma.done [#allocation4], 16
    $region29: #{tpu_custom_call.1} parent=1 // pred_fallthru
      _
    %157 = vsyncpa [#allocation4], 1

</llo_original>
